<compile_context>
chip_gen: v7x
topology: tpu7x:2x2x1
jax: 0.10.0
libtpu: 0.0.40
codegen_flags: <defaults>
</compile_context>

<pallas_src>
import functools
import math

import jax
import jax.numpy as jnp
from jax import lax
from jax.experimental import pallas as pl
from jax.experimental.pallas import tpu as pltpu

EPS = 1e-5                                  # InstanceNorm2d / BatchNorm2d default

_TARGET_BLOCK_BYTES = 4 * 1024 * 1024       # streaming block budget (stats / 2-pass apply)
_FUSED_BLOCK_BYTES = 3 * 1024 * 1024        # budget for fused (rows, L) blocks (more f32 temps)
_FUSED_MAX_BLOCK_BYTES = 8 * 1024 * 1024    # do not fuse IN if one minimal row block exceeds this
_STATS_MAX_LANE = 2048                      # lane tile cap for stats kernel (bounded unroll <= 16)
_VMEM_LIMIT_BYTES = 48 * 1024 * 1024        # <= v7x 64 MiB physical; plenty on v5e/v6e (128 MiB)
_MIN_ROW_BLOCKS = 2                         # keep >= 2 blocks on 'parallel' row axes (v7x megacore)


# ------------------------------ tile selection ------------------------------

def _sublane_quantum(dtype):
    """Dtype-aware sublane quantum: 8 for 4-byte, 16 for bf16, 32 for int8/fp8."""
    return max(8, 32 // jnp.dtype(dtype).itemsize)


def _largest_divisor_tile(dim, max_tile, quantum):
    """Largest multiple of `quantum` that divides `dim` and is <= max_tile.
    Returns None when no such divisor exists (caller decides the fallback)."""
    if dim % quantum != 0:
        return None
    t = min((max_tile // quantum) * quantum, dim)
    while t >= quantum:
        if dim % t == 0:
            return t
        t -= quantum
    return None


def _pick_tiles_2d(n_rows, n_cols, dtype, block_bytes):
    """(row, lane) tiles for a streaming (R, L) kernel: lane-dense multiple of
    128, row tile sized from the ACTUAL lane tile, >= 2 row blocks kept for
    megacore when the row count allows it."""
    itemsize = jnp.dtype(dtype).itemsize
    quantum = _sublane_quantum(dtype)
    lane_cap = max(128, block_bytes // (quantum * itemsize))
    tl = _largest_divisor_tile(n_cols, lane_cap, 128)
    if tl is None:
        tl = n_cols                              # full extent is always legal
    max_tr = max(quantum, block_bytes // (tl * itemsize))
    if n_rows >= _MIN_ROW_BLOCKS * quantum:
        cap = (n_rows // _MIN_ROW_BLOCKS) // quantum * quantum
        max_tr = max(quantum, min(max_tr, cap))
    tr = _largest_divisor_tile(n_rows, max_tr, quantum)
    if tr is None:
        tr = n_rows                              # small / odd row counts
    return tr, tl


def _pick_stats_tiles(c_start, c_count, length, dtype, block_bytes):
    """(channel, lane) tiles for the stats kernel over channels
    [c_start, c_start + c_count) of a (N, C, L) view.  Returns (tc, tl, nlg);
    tc is None when the channel sub-range cannot be tiled with an aligned
    offset (caller falls back to stats over all channels)."""
    itemsize = jnp.dtype(dtype).itemsize
    quantum = _sublane_quantum(dtype)
    lane_cap = max(128, min(_STATS_MAX_LANE, block_bytes // (quantum * itemsize)))
    tl = _largest_divisor_tile(length, lane_cap, 128)
    if tl is None:
        tl = length                              # full extent (always legal)
    nlg = tl // 128 if tl % 128 == 0 else 0      # lane groups for VALU-only partial sums
    g = math.gcd(c_count, c_start) if c_start else c_count
    max_tc = max(quantum, block_bytes // (tl * itemsize))
    tc = _largest_divisor_tile(g, max_tc, quantum)
    if tc is None:
        # Full channel extent is a legal block even when < quantum; an offset
        # sub-range is not representable without an aligned tile.
        tc = c_count if c_start == 0 else None
    return tc, tl, nlg


# ------------------------------- stats kernel -------------------------------

def _stats_kernel(x_ref, sum_ref, sq_ref, *, nlg):
    """Accumulate per-(n, c) sum / sum-of-squares over the (tiled) last axis.

    When nlg > 0 the partials stay lane-parallel (.., 128) -- pure VALU adds,
    no cross-lane reduce per block; the final 128-lane reduce happens in JAX on
    the tiny result.  Otherwise (lane tile not a multiple of 128) a normal
    cross-lane reduce into (.., 1) is used."""
    @pl.when(pl.program_id(2) == 0)
    def _():
        sum_ref[...] = jnp.zeros_like(sum_ref)
        sq_ref[...] = jnp.zeros_like(sq_ref)

    x = x_ref[...].astype(jnp.float32)           # (1, tc, tl)
    if nlg > 0:
        ps = x[:, :, 0:128]
        pq = ps * ps
        for g in range(1, nlg):                  # static, bounded unroll (<= 16)
            xg = x[:, :, g * 128:(g + 1) * 128]
            ps = ps + xg
            pq = pq + xg * xg
    else:
        ps = jnp.sum(x, axis=-1, keepdims=True)
        pq = jnp.sum(x * x, axis=-1, keepdims=True)
    sum_ref[...] += ps
    sq_ref[...] += pq


def _channel_stats(x3, c_start, c_count):
    """Per-(n, c) sum and sum-of-squares over L for channels
    [c_start, c_start + c_count) of x3: (N, C, L).  Returns (sums, sumsqs),
    each (N, c_count) float32, or None when the sub-range cannot be tiled."""
    N, C, L = x3.shape
    tc, tl, nlg = _pick_stats_tiles(c_start, c_count, L, x3.dtype,
                                    _TARGET_BLOCK_BYTES)
    if tc is None:
        return None
    K = 128 if nlg > 0 else 1
    c_blk0 = c_start // tc                       # aligned channel-block offset
    grid = (N, c_count // tc, L // tl)

    sums, sqs = pl.pallas_call(
        functools.partial(_stats_kernel, nlg=nlg),
        out_shape=(jax.ShapeDtypeStruct((N, c_count, K), jnp.float32),
                   jax.ShapeDtypeStruct((N, c_count, K), jnp.float32)),
        grid=grid,
        in_specs=[pl.BlockSpec((1, tc, tl), lambda n, c, l: (n, c_blk0 + c, l))],
        out_specs=(pl.BlockSpec((1, tc, K), lambda n, c, l: (n, c, 0)),
                   pl.BlockSpec((1, tc, K), lambda n, c, l: (n, c, 0))),
        compiler_params=pltpu.CompilerParams(
            dimension_semantics=("parallel", "parallel", "arbitrary"),
            vmem_limit_bytes=_VMEM_LIMIT_BYTES),
    )(x3)
    return sums.sum(axis=-1), sqs.sum(axis=-1)   # (N, c_count) each, f32


# ---------------------------- normalize / apply -----------------------------

def _norm_apply_kernel(x_ref, a_ref, b_ref, m_ref, o_ref, *, fuse_in):
    """y = x * scale + shift.

    fuse_in=True : full row (length L) resident in the block; InstanceNorm
                   mean/var computed in-kernel (centered variance, rsqrt on
                   EUP).  m == 1 marks IN rows, m == 0 marks BN rows (which use
                   the precomputed per-row scale/shift directly).
    fuse_in=False: plain per-row FMA with precomputed scale/shift."""
    x = x_ref[...].astype(jnp.float32)           # (tr, tl)
    a = a_ref[...]                               # (tr, 1) f32
    b = b_ref[...]
    if fuse_in:
        L = x.shape[1]
        m = m_ref[...]                           # (tr, 1) f32 in {0, 1}
        inv_l = jnp.float32(1.0 / L)
        mean = jnp.sum(x, axis=-1, keepdims=True) * inv_l
        xc = x - mean
        var = jnp.sum(xc * xc, axis=-1, keepdims=True) * inv_l
        rstd = m * lax.rsqrt(var + EPS) + (1.0 - m)
        scale = a * rstd
        shift = b - (m * mean) * scale
    else:
        scale = a
        shift = b
    o_ref[...] = (x * scale + shift).astype(o_ref.dtype)


def _norm_apply(x2d, a_row, b_row, m_row, *, fuse_in, donate_input=False):
    """x2d: (R, L); a_row/b_row/m_row: (R, 1) float32 -> (R, L) in x2d.dtype."""
    R, L = x2d.shape
    itemsize = jnp.dtype(x2d.dtype).itemsize
    quantum = _sublane_quantum(x2d.dtype)

    if fuse_in:
        # Full row resident: 1-D grid over row tiles, kept >= 2 blocks for
        # megacore when R allows it.
        max_tr = max(quantum, _FUSED_BLOCK_BYTES // (L * itemsize))
        if R >= _MIN_ROW_BLOCKS * quantum:
            cap = (R // _MIN_ROW_BLOCKS) // quantum * quantum
            max_tr = max(quantum, min(max_tr, cap))
        tr = _largest_divisor_tile(R, max_tr, quantum) or R
        grid = (R // tr,)
        x_spec = pl.BlockSpec((tr, L), lambda r: (r, 0))
        row_spec = pl.BlockSpec((tr, 1), lambda r: (r, 0))
        out_spec = pl.BlockSpec((tr, L), lambda r: (r, 0))
        semantics = ("parallel",)
    else:
        tr, tl = _pick_tiles_2d(R, L, x2d.dtype, _TARGET_BLOCK_BYTES)
        grid = (R // tr, L // tl)
        x_spec = pl.BlockSpec((tr, tl), lambda r, l: (r, l))
        # scale/shift/mask block index is constant in l (innermost), so the
        # pipeline keeps the resident copy instead of re-DMA'ing every step.
        row_spec = pl.BlockSpec((tr, 1), lambda r, l: (r, 0))
        out_spec = pl.BlockSpec((tr, tl), lambda r, l: (r, l))
        semantics = ("parallel", "parallel")

    return pl.pallas_call(
        functools.partial(_norm_apply_kernel, fuse_in=fuse_in),
        out_shape=jax.ShapeDtypeStruct((R, L), x2d.dtype),
        grid=grid,
        in_specs=[x_spec, row_spec, row_spec, row_spec],
        out_specs=out_spec,
        input_output_aliases={0: 0} if donate_input else {},
        compiler_params=pltpu.CompilerParams(
            dimension_semantics=semantics,
            vmem_limit_bytes=_VMEM_LIMIT_BYTES),
    )(x2d, a_row, b_row, m_row)


# --------------------------------- IBN forward ------------------------------

def ibn_forward(x, in_gamma, in_beta, bn_gamma, bn_beta, half, *,
                donate_input=False):
    """IBN forward. x: (N, C, H, W) NCHW; channels [0, half) -> InstanceNorm2d
    (affine), channels [half, C) -> BatchNorm2d (training-mode batch stats)."""
    N, C, H, W = x.shape
    nbn = C - half
    L = H * W
    R = N * C
    f32 = jnp.float32
    itemsize = jnp.dtype(x.dtype).itemsize
    quantum = _sublane_quantum(x.dtype)

    x2d = x.reshape(R, L)                    # free reshapes of contiguous NCHW
    x3 = x.reshape(N, C, L)

    # Fuse the InstanceNorm half into the apply pass (stats on the resident
    # (tr, L) block) whenever one minimal row block fits the budget.
    # TODO(synk): pathological L (huge with no multiple-of-128 divisor) could
    # still exceed the budget in the 2-pass fallback; would need in-kernel
    # lane masking to tile such shapes.
    fuse_in = half > 0 and quantum * L * itemsize <= _FUSED_MAX_BLOCK_BYTES

    # ---- Pass 1: channel statistics (read only what is still needed) -------
    s_nc = q_nc = None
    stats_c0 = 0
    if nbn > 0 and fuse_in:
        res = _channel_stats(x3, half, nbn)      # reads only the BN half
        if res is not None:
            s_nc, q_nc = res
            stats_c0 = half
    if s_nc is None and (nbn > 0 or not fuse_in):
        s_nc, q_nc = _channel_stats(x3, 0, C)    # full read (always tileable)
        stats_c0 = 0

    # ---- per-row scale / shift / IN mask (tiny (N, C) arrays, plain JAX) ---
    parts_a, parts_b, parts_m = [], [], []
    if half > 0:
        if fuse_in:
            a_in = jnp.broadcast_to(in_gamma.astype(f32)[None, :], (N, half))
            b_in = jnp.broadcast_to(in_beta.astype(f32)[None, :], (N, half))
        else:
            # 2-pass InstanceNorm fallback (L too large to keep rows resident).
            # One-pass E[x^2]-E[x]^2 variance, clamped at 0 against fp32
            # cancellation; the fused path uses a true centered variance.
            in_mean = s_nc[:, :half] / L
            in_var = jnp.maximum(q_nc[:, :half] / L - in_mean * in_mean, 0.0)
            a_in = in_gamma.astype(f32)[None, :] * lax.rsqrt(in_var + EPS)
            b_in = in_beta.astype(f32)[None, :] - in_mean * a_in
        parts_a.append(a_in)
        parts_b.append(b_in)
        parts_m.append(jnp.ones((N, half), f32))
    if nbn > 0:
        s_bn = s_nc[:, half - stats_c0:]
        q_bn = q_nc[:, half - stats_c0:]
        cnt = N * L
        bn_mean = s_bn.sum(axis=0) / cnt
        bn_var = jnp.maximum(q_bn.sum(axis=0) / cnt - bn_mean * bn_mean, 0.0)
        a_bn = bn_gamma.astype(f32) * lax.rsqrt(bn_var + EPS)
        b_bn = bn_beta.astype(f32) - bn_mean * a_bn
        parts_a.append(jnp.broadcast_to(a_bn[None, :], (N, nbn)))
        parts_b.append(jnp.broadcast_to(b_bn[None, :], (N, nbn)))
        parts_m.append(jnp.zeros((N, nbn), f32))
    a_row = jnp.concatenate(parts_a, axis=1).reshape(R, 1)
    b_row = jnp.concatenate(parts_b, axis=1).reshape(R, 1)
    m_row = jnp.concatenate(parts_m, axis=1).reshape(R, 1)

    # ---- Pass 2: normalize + affine, written directly in NCHW layout -------
    y2d = _norm_apply(x2d, a_row, b_row, m_row,
                      fuse_in=fuse_in, donate_input=donate_input)

    # TODO(synk): BatchNorm2d running_mean/running_var momentum updates are
    # training-only module-state side effects, not part of the returned tensor.
    return y2d.reshape(N, C, H, W)


# ---------------------------------- reference -------------------------------

def _reference(x, in_gamma, in_beta, bn_gamma, bn_beta, half):
    """Pure-JAX reference mirroring torch IBN.forward (training mode)."""
    xf = x.astype(jnp.float32)
    x1 = xf[:, :half]
    x2 = xf[:, half:]
    m1 = x1.mean(axis=(2, 3), keepdims=True)
    v1 = x1.var(axis=(2, 3), keepdims=True)
    o1 = (x1 - m1) / jnp.sqrt(v1 + EPS)
    o1 = o1 * in_gamma[None, :, None, None] + in_beta[None, :, None, None]
    m2 = x2.mean(axis=(0, 2, 3), keepdims=True)
    v2 = x2.var(axis=(0, 2, 3), keepdims=True)
    o2 = (x2 - m2) / jnp.sqrt(v2 + EPS)
    o2 = o2 * bn_gamma[None, :, None, None] + bn_beta[None, :, None, None]
    return jnp.concatenate([o1, o2], axis=1)


if __name__ == "__main__":
    def run_case(name, N, planes, H, W, dtype=jnp.float32, atol=5e-4):
        ratio = 0.5
        half = int(planes * ratio)
        key = jax.random.PRNGKey(0)
        kx, k1, k2, k3, k4 = jax.random.split(key, 5)
        x = jax.random.normal(kx, (N, planes, H, W), dtype=jnp.float32)
        # Per-channel offset/scale so IN vs BN statistics genuinely differ.
        c = jnp.arange(planes, dtype=jnp.float32)[None, :, None, None]
        x = (x * (1.0 + 0.05 * c) + 0.2 * c).astype(dtype)
        in_gamma = 1.0 + 0.1 * jax.random.normal(k1, (half,), jnp.float32)
        in_beta = 0.1 * jax.random.normal(k2, (half,), jnp.float32)
        bn_gamma = 1.0 + 0.1 * jax.random.normal(k3, (planes - half,), jnp.float32)
        bn_beta = 0.1 * jax.random.normal(k4, (planes - half,), jnp.float32)

        out = ibn_forward(x, in_gamma, in_beta, bn_gamma, bn_beta, half)
        out = jax.block_until_ready(out)
        ref = _reference(x, in_gamma, in_beta, bn_gamma, bn_beta, half)

        assert out.shape == x.shape, f"{name}: bad shape {out.shape}"
        assert out.dtype == x.dtype, f"{name}: bad dtype {out.dtype}"
        err = float(jnp.max(jnp.abs(out.astype(jnp.float32) - ref)))
        assert err <= atol, f"{name}: max abs err {err} > {atol}"

    # Fused IN + BN-only stats path (f32).
    run_case("fused_f32", N=2, planes=16, H=16, W=16)
    # Tiny channel count: exercises the full-channel stats fallback + fused apply.
    run_case("small_C", N=2, planes=4, H=16, W=16)
    # bf16 activations: dtype-aware sublane quantum (16) + BN-only stats path.
    run_case("bf16", N=2, planes=32, H=16, W=16, dtype=jnp.bfloat16, atol=5e-2)

    print("KERNEL_OK")
</pallas_src>

<mosaic_0001>
module attributes {stable_mosaic.version = 11 : i64} {
  func.func @_stats_kernel(%arg0: i32, %arg1: i32, %arg2: i32, %arg3: memref<1x8x256xf32, #tpu.memory_space<vmem>>, %arg4: memref<1x8x128xf32, #tpu.memory_space<vmem>>, %arg5: memref<1x8x128xf32, #tpu.memory_space<vmem>>) attributes {dimension_semantics = [#tpu.dimension_semantics<parallel>, #tpu.dimension_semantics<parallel>, #tpu.dimension_semantics<arbitrary>], iteration_bounds = array<i64: 2, 1, 1>, scalar_prefetch = 0 : i64, scratch_operands = 0 : i64, tpu.core_type = #tpu.core_type<tc>, window_params = [{transform_indices = @transform_0, window_bounds = array<i64: 1, 8, 256>}, {transform_indices = @transform_1, window_bounds = array<i64: 1, 8, 128>}, {transform_indices = @transform_2, window_bounds = array<i64: 1, 8, 128>}]} {
    %c0_i32 = arith.constant 0 : i32
    %0 = arith.cmpi eq, %arg2, %c0_i32 : i32
    %1 = arith.extui %0 : i1 to i32
    %c0_i32_0 = arith.constant 0 : i32
    %2 = arith.cmpi ne, %1, %c0_i32_0 : i32
    scf.if %2 {
      %cst = arith.constant 0.000000e+00 : f32
      %16 = vector.broadcast %cst : f32 to vector<1x8x128xf32>
      %c0_15 = arith.constant 0 : index
      %c0_16 = arith.constant 0 : index
      %c0_17 = arith.constant 0 : index
      %17 = vector.load %arg4[%c0_15, %c0_16, %c0_17] : memref<1x8x128xf32, #tpu.memory_space<vmem>>, vector<1x8x128xf32>
      tpu.vector_store %arg4[%c0_15, %c0_16, %c0_17], %16 {strides = array<i32>} : memref<1x8x128xf32, #tpu.memory_space<vmem>>, vector<1x8x128xf32>,
      %cst_18 = arith.constant 0.000000e+00 : f32
      %18 = vector.broadcast %cst_18 : f32 to vector<1x8x128xf32>
      %c0_19 = arith.constant 0 : index
      %c0_20 = arith.constant 0 : index
      %c0_21 = arith.constant 0 : index
      %19 = vector.load %arg5[%c0_19, %c0_20, %c0_21] : memref<1x8x128xf32, #tpu.memory_space<vmem>>, vector<1x8x128xf32>
      tpu.vector_store %arg5[%c0_19, %c0_20, %c0_21], %18 {strides = array<i32>} : memref<1x8x128xf32, #tpu.memory_space<vmem>>, vector<1x8x128xf32>,
    } else {
    }
    %c0 = arith.constant 0 : index
    %c0_1 = arith.constant 0 : index
    %c0_2 = arith.constant 0 : index
    %3 = vector.load %arg3[%c0, %c0_1, %c0_2] : memref<1x8x256xf32, #tpu.memory_space<vmem>>, vector<1x8x256xf32>
    %4 = vector.extract_strided_slice %3 {offsets = [0, 0, 0], sizes = [1, 8, 128], strides = [1, 1, 1]} : vector<1x8x256xf32> to vector<1x8x128xf32>
    %5 = arith.mulf %4, %4 : vector<1x8x128xf32>
    %6 = vector.extract_strided_slice %3 {offsets = [0, 0, 128], sizes = [1, 8, 128], strides = [1, 1, 1]} : vector<1x8x256xf32> to vector<1x8x128xf32>
    %7 = arith.addf %4, %6 : vector<1x8x128xf32>
    %8 = arith.mulf %6, %6 : vector<1x8x128xf32>
    %9 = arith.addf %5, %8 : vector<1x8x128xf32>
    %c0_3 = arith.constant 0 : index
    %c0_4 = arith.constant 0 : index
    %c0_5 = arith.constant 0 : index
    %10 = vector.load %arg4[%c0_3, %c0_4, %c0_5] : memref<1x8x128xf32, #tpu.memory_space<vmem>>, vector<1x8x128xf32>
    %11 = arith.addf %10, %7 : vector<1x8x128xf32>
    %c0_6 = arith.constant 0 : index
    %c0_7 = arith.constant 0 : index
    %c0_8 = arith.constant 0 : index
    %12 = vector.load %arg4[%c0_6, %c0_7, %c0_8] : memref<1x8x128xf32, #tpu.memory_space<vmem>>, vector<1x8x128xf32>
    tpu.vector_store %arg4[%c0_6, %c0_7, %c0_8], %11 {strides = array<i32>} : memref<1x8x128xf32, #tpu.memory_space<vmem>>, vector<1x8x128xf32>,
    %c0_9 = arith.constant 0 : index
    %c0_10 = arith.constant 0 : index
    %c0_11 = arith.constant 0 : index
    %13 = vector.load %arg5[%c0_9, %c0_10, %c0_11] : memref<1x8x128xf32, #tpu.memory_space<vmem>>, vector<1x8x128xf32>
    %14 = arith.addf %13, %9 : vector<1x8x128xf32>
    %c0_12 = arith.constant 0 : index
    %c0_13 = arith.constant 0 : index
    %c0_14 = arith.constant 0 : index
    %15 = vector.load %arg5[%c0_12, %c0_13, %c0_14] : memref<1x8x128xf32, #tpu.memory_space<vmem>>, vector<1x8x128xf32>
    tpu.vector_store %arg5[%c0_12, %c0_13, %c0_14], %14 {strides = array<i32>} : memref<1x8x128xf32, #tpu.memory_space<vmem>>, vector<1x8x128xf32>,
    return
  }
  func.func @transform_0(%arg0: i32, %arg1: i32, %arg2: i32) -> (i32, i32, i32) {
    %c1_i32 = arith.constant 1 : i32
    %0 = arith.addi %c1_i32, %arg1 : i32
    %c0_i32 = arith.constant 0 : i32
    return %arg0, %0, %arg2 : i32, i32, i32
  }
  func.func @transform_1(%arg0: i32, %arg1: i32, %arg2: i32) -> (i32, i32, i32) {
    %c0_i32 = arith.constant 0 : i32
    %c0_i32_0 = arith.constant 0 : i32
    return %arg0, %arg1, %c0_i32 : i32, i32, i32
  }
  func.func @transform_2(%arg0: i32, %arg1: i32, %arg2: i32) -> (i32, i32, i32) {
    %c0_i32 = arith.constant 0 : i32
    %c0_i32_0 = arith.constant 0 : i32
    return %arg0, %arg1, %c0_i32 : i32, i32, i32
  }
}

</mosaic_0001>

<llo_original>
// kernel: tpu_custom_call.1
$region0: #{tpu_custom_call.1}
  #allocation0 [shape = 'u32[]', space=smem, size = 0x4, offset = 0x4, fixed_abs, tag = 'smem constant byte address 0x4 - core index']
  #allocation1 [shape = 'u32[144,128]{1,0:T(1,128)}', space=vmem, size = 0x12000, scoped, tag = 'internal scratch']
  %s0 = inlined_call_operand.hbm [shape: f32[2,16,256], index: 0, kind: input, shape index: {}]
  %s1 = inlined_call_operand.hbm [shape: f32[2,8,128], index: 1, kind: output, shape index: {0}]
  %s2 = inlined_call_operand.hbm [shape: f32[2,8,128], index: 2, kind: output, shape index: {1}]
  %3 = xla_tuple %s1, %s2
  %s4 = sld [smem:[#allocation0]]
  $region53: #{tpu_custom_call.1} parent=0
    _
  %s6 = ssub.s32 1, %s4
  %s7 = scalar_select 0, %s6, %s4
  $region1: #{tpu_custom_call.1} parent=0
    #allocation2 [shape = 'u8[16384]{0}', space=vmem, size = 0x4000, scoped, tag = 'input window, operand 0']
    #allocation3 [shape = 's32[2]{0}', space=sflag, size = 0x8, scoped, tag = 'scoped memory for tpu_custom_call.1']
    #allocation4 [shape = 's32[2]{0}', space=sflag, size = 0x8, scoped, tag = 'scoped memory for tpu_custom_call.1']
    #allocation5 [shape = 'u8[8192]{0}', space=vmem, size = 0x2000, scoped, tag = 'output window, operand 0']
    #allocation6 [shape = 'u8[8192]{0}', space=vmem, size = 0x2000, scoped, tag = 'output window, operand 1']
    #allocation7 [shape = 's32[2]{0}', space=sflag, size = 0x8, scoped, tag = 'scoped memory for tpu_custom_call.1']
    %8 = vsyncpa [#allocation3], 0
    %s9 = scalar_lea.sflag [#allocation3], 1
    %10 = vsyncpa %s9, 0
    %11 = vsyncpa [#allocation4], 0
    %s12 = scalar_lea.sflag [#allocation4], 1
    %13 = vsyncpa %s12, 0
    %14 = vsyncpa [#allocation7], 0
    %s15 = scalar_lea.sflag [#allocation7], 1
    %16 = vsyncpa %s15, 0
    loop: start=0, step=1, limit=4
    $region2: #{tpu_custom_call.1} parent=1 // loop_pre_header
      _
    $region3: #{tpu_custom_call.1} parent=1 // loop_header
      %s18 = sphi 0, %s22
      %p19 = scmp.ge.s32.totalorder %s18, 4
      %s25 = sphi 0, %s44
      %s26 = sphi 0, %s40
      %s27 = sphi 0, %s36
      %s28 = sphi 0, %s25
      %s29 = sphi 0, %s26
      %s30 = sphi 0, %s27
      %s31 = sphi 0, %s28
      %s32 = sphi 0, %s29
      %s33 = sphi 0, %s30
      %s53 = sphi 0, %s55
      %s56 = sphi 0, %s53
      %s57 = sphi 0, %s56
      %s73 = sphi 0, %s57
      %s81 = sphi 0, %s83
      %s84 = sphi 0, %s81
      %s85 = sphi 0, %s84
      %s101 = sphi 0, %s85
      %s109 = sphi 0, %s111
      %s112 = sphi 0, %s109
      %s113 = sphi 0, %s112
      %s129 = sphi 0, %s113
    $region4: #{tpu_custom_call.1} parent=1 // loop_header_branch
      %21 = sbr.rel (%p19) target = $region8
    $region5: #{tpu_custom_call.1} parent=1 // loop_body
      %s23 = ssub.s32 %s18, 1
      %s24 = ssub.s32 %s18, 2
      %s34 = sadd.s32 1, %s27
      %p35 = scmp.ge.s32.totalorder %s34, 1
      %s36 = scalar_select %p35, 0, %s34
      %s37 = sadd.s32 1, %s26
      %s38 = scalar_select %p35, %s37, %s26
      %p39 = scmp.ge.s32.totalorder %s38, 1
      %s40 = scalar_select %p39, 0, %s38
      %s41 = sadd.s32 1, %s25
      %s42 = scalar_select %p39, %s41, %s25
      %p43 = scmp.ge.s32.totalorder %s42, 2
      %s44 = scalar_select %p43, 0, %s42
      %s45 = sadd.s32 %s26, 1
      %s46 = sadd.s32 %s40, 1
      %s47 = ssub.s32 %s25, %s44
      %s48 = ssub.s32 %s45, %s46
      %s49 = sor.u32 %s47, %s48
      %s50 = ssub.s32 %s27, %s36
      %s51 = sor.u32 %s49, %s50
      %p52 = scmp.eq.s32.totalorder %s51, 0
      %s54 = sadd.s32 %s53, 1
      %s55 = scalar_select %p52, %s53, %s54
      %p58 = pneg %p52
      %p59 = scmp.eq.s32.totalorder %s18, 1
      %p60 = por %p58, %p59
      %p61 = scmp.ne.s32.totalorder %s53, %s56
      %p62 = scmp.eq.s32.totalorder %s18, 0
      %p63 = por %p61, %p62
      %p64 = scmp.ne.s32.totalorder %s53, %s56
      %p65 = scmp.eq.s32.totalorder %s23, 1
      %p66 = por %p64, %p65
      %p67 = scmp.ne.s32.totalorder %s56, %s57
      %p68 = scmp.eq.s32.totalorder %s23, 0
      %p69 = por %p67, %p68
      %p70 = scmp.ne.s32.totalorder %s56, %s57
      %p71 = scmp.eq.s32.totalorder %s24, 1
      %p72 = por %p70, %p71
      %p74 = scmp.ne.s32.totalorder %s57, %s73
      %p75 = scmp.eq.s32.totalorder %s24, 0
      %p76 = por %p74, %p75
      %s77 = ssub.s32 %s25, %s44
      %s78 = ssub.s32 %s26, %s40
      %s79 = sor.u32 %s77, %s78
      %p80 = scmp.eq.s32.totalorder %s79, 0
      %s82 = sadd.s32 %s81, 1
      %s83 = scalar_select %p80, %s81, %s82
      %p86 = pneg %p80
      %p87 = scmp.eq.s32.totalorder %s18, 1
      %p88 = por %p86, %p87
      %p89 = scmp.ne.s32.totalorder %s81, %s84
      %p90 = scmp.eq.s32.totalorder %s18, 0
      %p91 = por %p89, %p90
      %p92 = scmp.ne.s32.totalorder %s81, %s84
      %p93 = scmp.eq.s32.totalorder %s23, 1
      %p94 = por %p92, %p93
      %p95 = scmp.ne.s32.totalorder %s84, %s85
      %p96 = scmp.eq.s32.totalorder %s23, 0
      %p97 = por %p95, %p96
      %p98 = scmp.ne.s32.totalorder %s84, %s85
      %p99 = scmp.eq.s32.totalorder %s24, 1
      %p100 = por %p98, %p99
      %p102 = scmp.ne.s32.totalorder %s85, %s101
      %p103 = scmp.eq.s32.totalorder %s24, 0
      %p104 = por %p102, %p103
      %s105 = ssub.s32 %s25, %s44
      %s106 = ssub.s32 %s26, %s40
      %s107 = sor.u32 %s105, %s106
      %p108 = scmp.eq.s32.totalorder %s107, 0
      %s110 = sadd.s32 %s109, 1
      %s111 = scalar_select %p108, %s109, %s110
      %p114 = pneg %p108
      %p115 = scmp.eq.s32.totalorder %s18, 1
      %p116 = por %p114, %p115
      %p117 = scmp.ne.s32.totalorder %s109, %s112
      %p118 = scmp.eq.s32.totalorder %s18, 0
      %p119 = por %p117, %p118
      %p120 = scmp.ne.s32.totalorder %s109, %s112
      %p121 = scmp.eq.s32.totalorder %s23, 1
      %p122 = por %p120, %p121
      %p123 = scmp.ne.s32.totalorder %s112, %s113
      %p124 = scmp.eq.s32.totalorder %s23, 0
      %p125 = por %p123, %p124
      %p126 = scmp.ne.s32.totalorder %s112, %s113
      %p127 = scmp.eq.s32.totalorder %s24, 1
      %p128 = por %p126, %p127
      %p130 = scmp.ne.s32.totalorder %s113, %s129
      %p131 = scmp.eq.s32.totalorder %s24, 0
      %p132 = por %p130, %p131
      %p133 = scmp.le.s32.totalorder 1, %s18
      %p134 = scmp.lt.s32.totalorder %s18, 3
      %p135 = pnand %p133, %p134
      %p136 = pneg %p135
      // Predicated region
      $region9: #{tpu_custom_call.1} parent=5 // pred_check
        _
      $region10: #{tpu_custom_call.1} parent=5 // pred_check_branch
        %138 = sbr.rel (%p135) target = $region12
      $region11: #{tpu_custom_call.1} parent=5 // pred_region
        %s139 = ssub.s32 %s18, 1
      $region12: #{tpu_custom_call.1} parent=5 // pred_fallthru
        _
      %p140 = scmp.lt.s32.totalorder %s18, 2
      // Predicated region
      $region13: #{tpu_custom_call.1} parent=5 // pred_check
        %p141 = pneg %p140
      $region14: #{tpu_custom_call.1} parent=5 // pred_check_branch
        %143 = sbr.rel (%p141) target = $region16
      $region15: #{tpu_custom_call.1} parent=5 // pred_region
        // Predicated region
        $region17: #{tpu_custom_call.1} parent=15 // pred_check
          %p144 = pneg %p63
        $region18: #{tpu_custom_call.1} parent=15 // pred_check_branch
          %146 = sbr.rel (%p144) target = $region20
        $region19: #{tpu_custom_call.1} parent=15 // pred_region
          %s147 = sand.u32 %s53, 1
          %s148 = scalar_lea.sflag [#allocation3], %s147
          %s149 = sand.u32 %s53, 1
          %s150 = smul.addr %s149, 16
          %s151 = scalar_lea.vmem [#allocation2], %s150
          %s152 = sadd.s32 %s26, 1
          %s153 = smul.u32 2, %s27
          %s155 = ssub.s32 256, 256
          %156 = vsyncadd %s148, %s155
          %s157 = smul.addr %s152, 2
          %s158 = sadd.s32 %s153, %s157
          %s159 = smul.addr %s25, 4
          %s160 = sadd.s32 %s158, %s159
          %s161 = smul.addr %s160, 128
          %s162 = scalar_lea.hbm %s0, %s161
          %s164 = sshll.u32 %s151, 4
          %s165 = int_to_ptr.vmem [resolvable:$true] %s164
          %167 = dma.hbm_to_vmem [thread:$0]  %s162, 256, %s165, %s148
        $region20: #{tpu_custom_call.1} parent=15 // pred_fallthru
          _
      $region16: #{tpu_custom_call.1} parent=5 // pred_fallthru
        _
      %p168 = scmp.le.s32.totalorder 1, %s18
      %p169 = scmp.lt.s32.totalorder %s18, 3
      %p170 = pnand %p168, %p169
      %p171 = pneg %p170
      // Predicated region
      $region21: #{tpu_custom_call.1} parent=5 // pred_check
        _
      $region22: #{tpu_custom_call.1} parent=5 // pred_check_branch
        %173 = sbr.rel (%p170) target = $region24
      $region23: #{tpu_custom_call.1} parent=5 // pred_region
        %s174 = ssub.s32 %s18, 1
        %s175 = sand.u32 %s56, 1
        %s176 = scalar_lea.sflag [#allocation3], %s175
        %s177 = sand.u32 %s56, 1
        %s178 = smul.addr %s177, 16
        %s179 = scalar_lea.vmem [#allocation2], %s178
        // Predicated region
        $region25: #{tpu_custom_call.1} parent=23 // pred_check
          %p180 = pneg %p69
        $region26: #{tpu_custom_call.1} parent=23 // pred_check_branch
          %182 = sbr.rel (%p180) target = $region28
        $region27: #{tpu_custom_call.1} parent=23 // pred_region
          %183 = dma.done %s176, 256
        $region28: #{tpu_custom_call.1} parent=23 // pred_fallthru
          _
        %s184 = sand.u32 %s56, 1
        %s185 = scalar_lea.sflag [#allocation3], %s184
        %s186 = sand.u32 %s56, 1
        %s187 = smul.addr %s186, 16
        %s188 = scalar_lea.vmem [#allocation2], %s187
        %p189 = pneg %p69
        %p190 = pneg %p66
        %p191 = pneg %p97
        %p192 = pneg %p94
        %s193 = sand.u32 %s84, 1
        %s194 = scalar_lea.sflag [#allocation4], %s193
        %s195 = sand.u32 %s84, 1
        %s196 = smul.addr %s195, 8
        %s197 = scalar_lea.vmem [#allocation5], %s196
        %p198 = pneg %p125
        %p199 = pneg %p122
        %s200 = sand.u32 %s112, 1
        %s201 = scalar_lea.sflag [#allocation7], %s200
        %s202 = sand.u32 %s112, 1
        %s203 = smul.addr %s202, 8
        %s204 = scalar_lea.vmem [#allocation6], %s203
        %s205 = sadd.s32 %s29, 1
        %s206 = smul.u32 2, %s30
        %p207 = scmp.eq.s32.totalorder %s30, 0
        // Predicated region
        $region29: #{tpu_custom_call.1} parent=23 // pred_check
          %p208 = pneg %p207
        $region30: #{tpu_custom_call.1} parent=23 // pred_check_branch
          %210 = sbr.rel (%p208) target = $region32
        $region31: #{tpu_custom_call.1} parent=23 // pred_region
          %211 = vst [vmem:[%s197] sm:$0xff] 0.0
          %212 = vst [vmem:[%s204] sm:$0xff] 0.0
        $region32: #{tpu_custom_call.1} parent=23 // pred_fallthru
          _
        %v213 = vld [vmem:[%s179] sm:$0xff]
        %v214 = vld [vmem:[%s179 + $0x8] sm:$0xff]
        %v215 = vmul.f32 %v213, %v213
        %v216 = vadd.f32 %v213, %v214
        %v217 = vmul.f32 %v214, %v214
        %v218 = vadd.f32 %v215, %v217
        %v219 = vld [vmem:[%s197] sm:$0xff]
        %v220 = vadd.f32 %v219, %v216
        %221 = vst [vmem:[%s197] sm:$0xff] %v220
        %v222 = vld [vmem:[%s204] sm:$0xff]
        %v223 = vadd.f32 %v222, %v218
        %224 = vst [vmem:[%s204] sm:$0xff] %v223
        %s225 = sand.u32 %s84, 1
        %s226 = scalar_lea.sflag [#allocation4], %s225
        %s227 = sand.u32 %s84, 1
        %s228 = smul.addr %s227, 8
        %s229 = scalar_lea.vmem [#allocation5], %s228
        %s230 = sand.u32 %s112, 1
        %s231 = scalar_lea.sflag [#allocation7], %s230
        %s232 = sand.u32 %s112, 1
        %s233 = smul.addr %s232, 8
        %s234 = scalar_lea.vmem [#allocation6], %s233
        // Predicated region
        $region33: #{tpu_custom_call.1} parent=23 // pred_check
          %p235 = pneg %p94
        $region34: #{tpu_custom_call.1} parent=23 // pred_check_branch
          %237 = sbr.rel (%p235) target = $region36
        $region35: #{tpu_custom_call.1} parent=23 // pred_region
          %s239 = ssub.s32 128, 128
          %240 = vsyncadd %s226, %s239
          %s241 = sadd.s32 %s29, %s28
          %s242 = smul.addr %s241, 128
          %s243 = scalar_lea.hbm %s1, %s242
          %s245 = sshll.u32 %s229, 4
          %s246 = int_to_ptr.vmem [resolvable:$true] %s245
          %248 = dma.vmem_to_hbm [thread:$0]  %s246, 128, %s243, %s226
        $region36: #{tpu_custom_call.1} parent=23 // pred_fallthru
          _
        // Predicated region
        $region37: #{tpu_custom_call.1} parent=23 // pred_check
          %p249 = pneg %p122
        $region38: #{tpu_custom_call.1} parent=23 // pred_check_branch
          %251 = sbr.rel (%p249) target = $region40
        $region39: #{tpu_custom_call.1} parent=23 // pred_region
          %s253 = ssub.s32 128, 128
          %254 = vsyncadd %s231, %s253
          %s255 = sadd.s32 %s29, %s28
          %s256 = smul.addr %s255, 128
          %s257 = scalar_lea.hbm %s2, %s256
          %s259 = sshll.u32 %s234, 4
          %s260 = int_to_ptr.vmem [resolvable:$true] %s259
          %262 = dma.vmem_to_hbm [thread:$0]  %s260, 128, %s257, %s231
        $region40: #{tpu_custom_call.1} parent=23 // pred_fallthru
          _
      $region24: #{tpu_custom_call.1} parent=5 // pred_fallthru
        _
      %p263 = scmp.le.s32.totalorder 2, %s18
      // Predicated region
      $region41: #{tpu_custom_call.1} parent=5 // pred_check
        %p264 = pneg %p263
      $region42: #{tpu_custom_call.1} parent=5 // pred_check_branch
        %266 = sbr.rel (%p264) target = $region44
      $region43: #{tpu_custom_call.1} parent=5 // pred_region
        %s267 = ssub.s32 %s18, 2
        // Predicated region
        $region45: #{tpu_custom_call.1} parent=43 // pred_check
          %p268 = pneg %p100
        $region46: #{tpu_custom_call.1} parent=43 // pred_check_branch
          %270 = sbr.rel (%p268) target = $region48
        $region47: #{tpu_custom_call.1} parent=43 // pred_region
          %s271 = sand.u32 %s85, 1
          %s272 = scalar_lea.sflag [#allocation4], %s271
          %s273 = sand.u32 %s85, 1
          %s274 = smul.addr %s273, 8
          %s275 = scalar_lea.vmem [#allocation5], %s274
          %276 = dma.done %s272, 128
        $region48: #{tpu_custom_call.1} parent=43 // pred_fallthru
          _
        // Predicated region
        $region49: #{tpu_custom_call.1} parent=43 // pred_check
          %p277 = pneg %p128
        $region50: #{tpu_custom_call.1} parent=43 // pred_check_branch
          %279 = sbr.rel (%p277) target = $region52
        $region51: #{tpu_custom_call.1} parent=43 // pred_region
          %s280 = sand.u32 %s113, 1
          %s281 = scalar_lea.sflag [#allocation7], %s280
          %s282 = sand.u32 %s113, 1
          %s283 = smul.addr %s282, 8
          %s284 = scalar_lea.vmem [#allocation6], %s283
          %285 = dma.done %s281, 128
        $region52: #{tpu_custom_call.1} parent=43 // pred_fallthru
          _
      $region44: #{tpu_custom_call.1} parent=5 // pred_fallthru
        _
    $region6: #{tpu_custom_call.1} parent=1 // loop_footer
      %s22 = sadd.s32 1, %s18
    $region7: #{tpu_custom_call.1} parent=1 // loop_footer_branch
      %17 = sbr.rel target = $region3
    $region8: #{tpu_custom_call.1} parent=1 // loop_exit
      _
    %286 = vsyncpa [#allocation3], 1
    %s287 = scalar_lea.sflag [#allocation3], 1
    %288 = vsyncpa %s287, 1
    %289 = vsyncpa [#allocation4], 1
    %s290 = scalar_lea.sflag [#allocation4], 1
    %291 = vsyncpa %s290, 1
    %292 = vsyncpa [#allocation7], 1
    %s293 = scalar_lea.sflag [#allocation7], 1
    %294 = vsyncpa %s293, 1

</llo_original>
